<compile_context>
chip_gen: v6e
topology: v6e:2x2x1
jax: 0.10.0
libtpu: 0.0.40
codegen_flags: <defaults>
</compile_context>

<pallas_src>
import functools

import jax
import jax.numpy as jnp
from jax.experimental import pallas as pl
from jax.experimental.pallas import tpu as pltpu

_MIB = 1024 * 1024


# ---------------------------------------------------------------------------
# Kernel: o = y + (x - y) * w   (== x*w + y*(1-w), one fewer full-tile mul)
# ---------------------------------------------------------------------------
def _mix_kernel(w_ref, x_ref, y_ref, o_ref):
    # w_ref : [1, L] mixing-weight row (sublane-broadcast against the tile)
    # x/y/o : [TR, L] activation tiles
    w = w_ref[...]
    x = x_ref[...].astype(w.dtype)
    y = y_ref[...].astype(w.dtype)
    o_ref[...] = (y + (x - y) * w).astype(o_ref.dtype)


# ---------------------------------------------------------------------------
# Generation-aware budgets (VMEM limit, per-stream tile target, device kind).
# ---------------------------------------------------------------------------
def _tpu_budgets():
    kind = ""
    try:
        kind = jax.devices()[0].device_kind.lower()
    except Exception:
        pass
    vmem_cap = None
    try:
        vmem_cap = int(pltpu.get_tpu_info().vmem_capacity_bytes)
    except Exception:
        vmem_cap = None
    if not vmem_cap or vmem_cap <= 0:
        vmem_cap = 64 * _MIB          # conservative (v7x-sized) fallback
    # Scoped VMEM: 3/4 of physical, capped at 96 MiB (v7x -> 48, v5e/v6e -> 96).
    vmem_limit = min((vmem_cap * 3) // 4, 96 * _MIB)
    # 3 streams (x, y, out) x 2 pipeline buffers must fit under the limit.
    tile_target = min(8 * _MIB, vmem_limit // 6)
    return vmem_limit, tile_target, kind


def _fold_lanes(rows, lanes, min_lane=512, max_lane=4096):
    """Fold k consecutive rows into the lane dim so the lane extent is a
    large multiple of 128 (unmasked vst, long DMA rows). k must divide rows."""
    if lanes % 128 == 0 and lanes >= min_lane:
        return 1
    if lanes >= max_lane:
        return 1
    divisors = set()
    i = 1
    while i * i <= rows:
        if rows % i == 0:
            divisors.add(i)
            divisors.add(rows // i)
        i += 1
    best = 1
    for k in sorted(divisors):
        if lanes * k > max_lane:
            break
        if (lanes * k) % 128 != 0:
            continue
        best = k
        if lanes * k >= min_lane:
            return k
    return best


def _choose_block_rows(rows, row_bytes, sublane, target_bytes, min_steps=4):
    """Row-tile height: ~target_bytes per stream, multiple of the sublane pack,
    capped so the grid keeps >= min_steps steps, preferring an even divisor."""
    if rows <= sublane:
        return rows
    tr = (target_bytes // max(row_bytes, 1)) // sublane * sublane
    tr = max(sublane, tr)
    tr = min(tr, rows)
    # Keep >= min_steps grid steps so v7x's two TensorCores both stay busy.
    cap = (rows // min_steps) // sublane * sublane
    if cap >= sublane:
        tr = min(tr, cap)
    # Prefer a tr that divides rows evenly (no ragged/masked last tile),
    # but never shrink the tile by more than 2x for it.
    t = tr
    while t >= sublane:
        if rows % t == 0:
            if 2 * t >= tr:
                tr = t
            break
        t -= sublane
    return tr


def logit(p, eps=1e-6):
    p = jnp.clip(jnp.asarray(p, jnp.float32), eps, 1.0 - eps)
    return jnp.log(p) - jnp.log1p(-p)


def make_mixer_params(shape, init_p=0.9, init_q=0.1, adversarial=False):
    """Deterministic init matching Mixer.__init__ (logit-filled parameters)."""
    p_logit = jnp.full(shape, logit(init_p), dtype=jnp.float32)
    if adversarial:
        q_logit = jnp.full(shape, logit(init_q), dtype=jnp.float32)
        return p_logit, q_logit
    return p_logit, None


@functools.partial(jax.jit, static_argnames=("adversarial",))
def mixer_forward(x, y, p_logit, q_logit=None, *, adversarial=False):
    if adversarial and q_logit is None:
        raise ValueError("adversarial=True requires q_logit")
    assert y.shape == x.shape and y.dtype == x.dtype
    B, S, H, E = x.shape

    vmem_limit, tile_target, kind = _tpu_budgets()

    # bf16 VALU exists on v6e/v7x -> compute natively; widen to f32 elsewhere.
    if x.dtype == jnp.bfloat16 and "v5" not in kind:
        compute_dtype = jnp.bfloat16
    else:
        compute_dtype = jnp.float32

    # --- Hoist the mixing weight out of the kernel (tiny, runs once). -------
    p = jax.nn.sigmoid(p_logit.astype(jnp.float32))
    if adversarial:
        # TODO(synk): ReverseGrad only alters the backward pass (gradient
        # reversal); forward semantics are identity, so no custom VJP here.
        q = jax.nn.sigmoid(q_logit.astype(jnp.float32))
        w = p + q - p * q
    else:
        w = p
    # Parameter must broadcast against the trailing (heads, emb) dims
    # (e.g. (H, 1) for loc_type='head'); shapes varying over batch/seq are
    # not supported by this flattened layout.
    w_flat = jnp.broadcast_to(w, (H, E)).reshape(1, H * E).astype(compute_dtype)

    # --- Flatten activations to a lane-dense [rows, lanes] slab. ------------
    rows, lanes = B * S, H * E
    fold = _fold_lanes(rows, lanes)
    rows_f, lanes_f = rows // fold, lanes * fold
    xf = x.reshape(rows_f, lanes_f)
    yf = y.reshape(rows_f, lanes_f)
    w_row = jnp.tile(w_flat, (1, fold)) if fold > 1 else w_flat

    itemsize = jnp.dtype(x.dtype).itemsize
    sublane = 8 * max(1, 4 // itemsize)            # 8 for f32, 16 for bf16
    tr = _choose_block_rows(rows_f, lanes_f * itemsize, sublane, tile_target)
    grid = (pl.cdiv(rows_f, tr),)

    act_spec = pl.BlockSpec((tr, lanes_f), lambda r: (r, 0))
    w_spec = pl.BlockSpec((1, lanes_f), lambda r: (0, 0))

    n_elems = rows * lanes
    cost = pl.CostEstimate(
        flops=3 * n_elems,
        transcendentals=0,
        bytes_accessed=3 * n_elems * itemsize
        + lanes_f * jnp.dtype(compute_dtype).itemsize,
    )

    out = pl.pallas_call(
        _mix_kernel,
        out_shape=jax.ShapeDtypeStruct((rows_f, lanes_f), x.dtype),
        grid_spec=pltpu.PrefetchScalarGridSpec(
            num_scalar_prefetch=0,
            grid=grid,
            in_specs=[w_spec, act_spec, act_spec],
            out_specs=act_spec,
        ),
        compiler_params=pltpu.CompilerParams(
            dimension_semantics=("parallel",),
            vmem_limit_bytes=vmem_limit,
        ),
        cost_estimate=cost,
    )(w_row, xf, yf)
    return out.reshape(B, S, H, E)


def mixer_reference(x, y, p_logit, q_logit=None, adversarial=False):
    p = jax.nn.sigmoid(p_logit)
    if adversarial:
        q = jax.nn.sigmoid(q_logit)
        w = p + q - p * q
    else:
        w = p
    return x * w + y * (1.0 - w)


if __name__ == "__main__":
    # activations: [batch, seqpos, heads, embsize]; mixer weights: [heads, 1]
    B, S, H, E = 2, 8, 4, 32
    key = jax.random.PRNGKey(0)
    kx, ky = jax.random.split(key)
    x = jax.random.normal(kx, (B, S, H, E), dtype=jnp.float32)
    y = jax.random.normal(ky, (B, S, H, E), dtype=jnp.float32)

    # Non-adversarial mixer (loc_type='head', shape=(heads, 1)).
    p_logit, _ = make_mixer_params((H, 1), init_p=0.9, adversarial=False)
    out = mixer_forward(x, y, p_logit, adversarial=False)
    jax.block_until_ready(out)
    ref = mixer_reference(x, y, p_logit)
    assert jnp.allclose(out, ref, atol=1e-6, rtol=1e-6), "non-adversarial mismatch"

    # Adversarial mixer.
    p_logit, q_logit = make_mixer_params((H, 1), init_p=0.9, init_q=0.1,
                                         adversarial=True)
    out_adv = mixer_forward(x, y, p_logit, q_logit, adversarial=True)
    jax.block_until_ready(out_adv)
    ref_adv = mixer_reference(x, y, p_logit, q_logit, adversarial=True)
    assert jnp.allclose(out_adv, ref_adv, atol=1e-6, rtol=1e-6), "adversarial mismatch"

    # bf16 I/O path (native bf16 compute on v6e/v7x, f32 widen on v5e).
    xb = x.astype(jnp.bfloat16)
    yb = y.astype(jnp.bfloat16)
    out_bf = mixer_forward(xb, yb, p_logit, adversarial=False)
    jax.block_until_ready(out_bf)
    ref_bf = mixer_reference(xb.astype(jnp.float32), yb.astype(jnp.float32), p_logit)
    assert jnp.allclose(out_bf.astype(jnp.float32), ref_bf, atol=2e-2, rtol=2e-2), \
        "bf16 mismatch"

    print("KERNEL_OK")
</pallas_src>

<mosaic_0001>
module attributes {stable_mosaic.version = 11 : i64} {
  func.func @_mix_kernel(%arg0: i32, %arg1: memref<1x512xf32, #tpu.memory_space<vmem>>, %arg2: memref<4x512xf32, #tpu.memory_space<vmem>>, %arg3: memref<4x512xf32, #tpu.memory_space<vmem>>, %arg4: memref<4x512xf32, #tpu.memory_space<vmem>>) attributes {dimension_semantics = [#tpu.dimension_semantics<parallel>], iteration_bounds = array<i64: 1>, scalar_prefetch = 0 : i64, scratch_operands = 0 : i64, tpu.core_type = #tpu.core_type<tc>, window_params = [{pipeline_mode = #tpu.pipeline_mode<synchronous>, transform_indices = @transform_0, window_bounds = array<i64: 1, 512>}, {transform_indices = @transform_1, window_bounds = array<i64: 4, 512>}, {transform_indices = @transform_2, window_bounds = array<i64: 4, 512>}, {transform_indices = @transform_3, window_bounds = array<i64: 4, 512>}]} {
    %c0 = arith.constant 0 : index
    %c0_0 = arith.constant 0 : index
    %0 = vector.load %arg1[%c0, %c0_0] : memref<1x512xf32, #tpu.memory_space<vmem>>, vector<1x512xf32>
    %c0_1 = arith.constant 0 : index
    %c0_2 = arith.constant 0 : index
    %1 = vector.load %arg2[%c0_1, %c0_2] : memref<4x512xf32, #tpu.memory_space<vmem>>, vector<4x512xf32>
    %c0_3 = arith.constant 0 : index
    %c0_4 = arith.constant 0 : index
    %2 = vector.load %arg3[%c0_3, %c0_4] : memref<4x512xf32, #tpu.memory_space<vmem>>, vector<4x512xf32>
    %3 = arith.subf %1, %2 : vector<4x512xf32>
    %4 = vector.broadcast %0 : vector<1x512xf32> to vector<4x512xf32>
    %5 = arith.mulf %3, %4 : vector<4x512xf32>
    %6 = arith.addf %2, %5 : vector<4x512xf32>
    %c0_5 = arith.constant 0 : index
    %c0_6 = arith.constant 0 : index
    %7 = vector.load %arg4[%c0_5, %c0_6] : memref<4x512xf32, #tpu.memory_space<vmem>>, vector<4x512xf32>
    tpu.vector_store %arg4[%c0_5, %c0_6], %6 {strides = array<i32>} : memref<4x512xf32, #tpu.memory_space<vmem>>, vector<4x512xf32>,
    return
  }
  func.func @transform_0(%arg0: i32) -> (i32, i32) {
    %c0_i32 = arith.constant 0 : i32
    %c0_i32_0 = arith.constant 0 : i32
    %c0_i32_1 = arith.constant 0 : i32
    return %c0_i32, %c0_i32_0 : i32, i32
  }
  func.func @transform_1(%arg0: i32) -> (i32, i32) {
    %c0_i32 = arith.constant 0 : i32
    %c0_i32_0 = arith.constant 0 : i32
    return %arg0, %c0_i32 : i32, i32
  }
  func.func @transform_2(%arg0: i32) -> (i32, i32) {
    %c0_i32 = arith.constant 0 : i32
    %c0_i32_0 = arith.constant 0 : i32
    return %arg0, %c0_i32 : i32, i32
  }
  func.func @transform_3(%arg0: i32) -> (i32, i32) {
    %c0_i32 = arith.constant 0 : i32
    %c0_i32_0 = arith.constant 0 : i32
    return %arg0, %c0_i32 : i32, i32
  }
}

</mosaic_0001>

<llo_original>
// kernel: mixer_forward.1
$region0: #{mixer_forward.1}
  #allocation0 [shape = 'u32[]', space=smem, size = 0x4, offset = 0x4, fixed_abs, tag = 'smem constant byte address 0x4 - core index']
  #allocation1 [shape = 'u32[144,128]{1,0:T(1,128)}', space=vmem, size = 0x12000, scoped, tag = 'internal scratch']
  %s0 = inlined_call_operand.vmem [shape: f32[1,512], index: 0, kind: input, shape index: {}]
  %s1 = inlined_call_operand.vmem [shape: f32[4,512], index: 1, kind: input, shape index: {}]
  %s2 = inlined_call_operand.vmem [shape: f32[4,512], index: 2, kind: input, shape index: {}]
  %s3 = inlined_call_operand.vmem [shape: f32[4,512], index: 3, kind: output, shape index: {}]
  %s4 = sld [smem:[#allocation0]]
  $region22: #{mixer_forward.1} parent=0
    _
  %s6 = ssub.s32 1, %s4
  %s7 = scalar_select 0, %s6, %s4
  // Predicated region
  $region2: #{mixer_forward.1} parent=0 // pred_check
    _
  $region3: #{mixer_forward.1} parent=0 // pred_check_branch
    %9 = sbr.rel (0) target = $region5
  $region4: #{mixer_forward.1} parent=0 // pred_region
    _
  $region5: #{mixer_forward.1} parent=0 // pred_fallthru
    _
  // Predicated region
  $region6: #{mixer_forward.1} parent=0 // pred_check
    _
  $region7: #{mixer_forward.1} parent=0 // pred_check_branch
    %11 = sbr.rel (0) target = $region9
  $region8: #{mixer_forward.1} parent=0 // pred_region
    _
  $region9: #{mixer_forward.1} parent=0 // pred_fallthru
    _
  // Predicated region
  $region10: #{mixer_forward.1} parent=0 // pred_check
    _
  $region11: #{mixer_forward.1} parent=0 // pred_check_branch
    %13 = sbr.rel (0) target = $region13
  $region12: #{mixer_forward.1} parent=0 // pred_region
    _
  $region13: #{mixer_forward.1} parent=0 // pred_fallthru
    _
  %v14 = vld [vmem:[%s0] sm:$0xf]
  %v15 = vld [vmem:[%s1] sm:$0xff]
  %v16 = vld [vmem:[%s1 + $0x8] sm:$0xff]
  %v17 = vld [vmem:[%s2] sm:$0xff]
  %v18 = vld [vmem:[%s2 + $0x8] sm:$0xff]
  %v19 = vsub.f32 %v15, %v17
  %v20 = vsub.f32 %v16, %v18
  %v22 = vlaneseq
  %v23 = vshrl.u32 %v22, 7
  %v24 = vsub.s32 0, %v23
  %v25 = vrot.slane %v14, %v24
  %v26 = vlaneseq
  %v27 = vshrl.u32 %v26, 7
  %v28 = vsub.s32 1, %v27
  %v29 = vrot.slane %v14, %v28
  %v30 = vlaneseq
  %v31 = vshrl.u32 %v30, 7
  %v32 = vsub.s32 2, %v31
  %v33 = vrot.slane %v14, %v32
  %v34 = vlaneseq
  %v35 = vshrl.u32 %v34, 7
  %v36 = vsub.s32 3, %v35
  %v37 = vrot.slane %v14, %v36
  %v38 = vcombine.low %v25, %v29
  %v39 = vcombine.low %v33, %v37
  %v42 = vmul.f32 %v19, %v38
  %v43 = vmul.f32 %v20, %v39
  %v44 = vadd.f32 %v17, %v42
  %v45 = vadd.f32 %v18, %v43
  %46 = vst [vmem:[%s3] sm:$0xff] %v44
  %47 = vst [vmem:[%s3 + $0x8] sm:$0xff] %v45
  // Predicated region
  $region14: #{mixer_forward.1} parent=0 // pred_check
    _
  $region15: #{mixer_forward.1} parent=0 // pred_check_branch
    %49 = sbr.rel (0) target = $region17
  $region16: #{mixer_forward.1} parent=0 // pred_region
    _
  $region17: #{mixer_forward.1} parent=0 // pred_fallthru
    _
  // Predicated region
  $region18: #{mixer_forward.1} parent=0 // pred_check
    _
  $region19: #{mixer_forward.1} parent=0 // pred_check_branch
    %51 = sbr.rel (0) target = $region21
  $region20: #{mixer_forward.1} parent=0 // pred_region
    _
  $region21: #{mixer_forward.1} parent=0 // pred_fallthru
    _

</llo_original>
